<compile_context>
chip_gen: v7x
topology: tpu7x:2x2x1
jax: 0.10.0
libtpu: 0.0.40
codegen_flags: <defaults>
</compile_context>

<pallas_src>
import jax
import jax.numpy as jnp
from jax import lax
from jax.experimental import pallas as pl
from jax.experimental.pallas import tpu as pltpu

# ---- small-but-consistent hyper-parameters (structure of P4 preserved) ----
B = 2
F1 = 8
F2 = 16
D = 2
NT = 64            # nt, must be divisible by 32 (fc uses nt // 32)
NC = 8             # nc
CLASSES = 8
IK1, IK2, IK3 = 15, 7, 3      # Inception temporal kernel widths (odd, 'same' pad)
PAD = IK1 // 2
NTP = NT + IK1 - 1            # padded time length
C2 = F1 * D
T1 = NT // 4
T2 = T1 // 8
BN_EPS = 1e-5


# ---------------------------------------------------------------------------
# Single fused kernel
# ---------------------------------------------------------------------------
def pronet_kernel(x_ref, t0_ref, w2bd_ref, sh2_ref, p1_ref, w4_ref, sh3_ref,
                  p2_ref, wfc_ref, fcb_ref, out_ref):
    # x_ref    : (B*NC, NTP+1)        padded input with a trailing ones column
    # t0_ref   : (NTP+1, F1*NT)       Toeplitz conv0 weight, BN0 + biases folded
    # w2bd_ref : (C2, F1*NC)          block-diag grouped-conv weight, BN2 scale folded
    # sh2_ref  : (C2, 1)              BN2 shift
    # p1_ref   : (B*NT, B*T1)         AvgPool(1,4), block-diag over batch
    # w4_ref   : (F2, C2)             1x1 conv4 weight, BN3 scale folded
    # sh3_ref  : (F2, 1)              BN3 shift
    # p2_ref   : (T1, T2)             AvgPool(1,8)
    # wfc_ref  : (T2*CLASSES, F2)     fc weight regrouped per pool2 time index
    # fcb_ref  : (CLASSES, 1)         fc bias
    # out_ref  : (CLASSES, B)         logits^T

    # --- Inception conv0 + BN0: one Toeplitz MXU matmul (lane-dense output) ---
    y0 = jnp.dot(x_ref[...], t0_ref[...],
                 preferred_element_type=jnp.float32)          # (B*NC, F1*NT)

    # --- relayout (b,c)x(f,t) -> (f,c)x(b,t); WTConv2d identity => re1/re2 cancel
    blocks = []
    for f in range(F1):
        b0 = y0[0:NC, f * NT:(f + 1) * NT]                    # batch 0
        b1 = y0[NC:2 * NC, f * NT:(f + 1) * NT]               # batch 1
        blocks.append(jnp.concatenate([b0, b1], axis=1))      # (NC, B*NT)
    g = jnp.concatenate(blocks, axis=0)                       # (F1*NC, B*NT)

    # --- grouped conv2 (single block-diagonal matmul) + BN2 shift + ELU ---
    z = jnp.dot(w2bd_ref[...], g, preferred_element_type=jnp.float32)  # (C2, B*NT)
    z = z + sh2_ref[...]
    z = jnp.where(z > 0.0, z, jnp.exp(jnp.minimum(z, 0.0)) - 1.0)

    # --- AvgPool(1,4) as block-diag matmul over (batch, time) ---
    zp = jnp.dot(z, p1_ref[...], preferred_element_type=jnp.float32)   # (C2, B*T1)

    # --- 1x1 conv4 (BN3 scale folded) + shift + ELU ---
    u = jnp.dot(w4_ref[...], zp, preferred_element_type=jnp.float32)   # (F2, B*T1)
    u = u + sh3_ref[...]
    u = jnp.where(u > 0.0, u, jnp.exp(jnp.minimum(u, 0.0)) - 1.0)

    # --- AvgPool(1,8) + flatten + fc, per batch (B is tiny & static) ---
    for b in range(B):
        ub = u[:, b * T1:(b + 1) * T1]                         # (F2, T1)
        u2 = jnp.dot(ub, p2_ref[...],
                     preferred_element_type=jnp.float32)       # (F2, T2)
        c_all = jnp.dot(wfc_ref[...], u2,
                        preferred_element_type=jnp.float32)    # (T2*CLASSES, T2)
        col = fcb_ref[...]
        for t2 in range(T2):
            col = col + c_all[t2 * CLASSES:(t2 + 1) * CLASSES, t2:t2 + 1]
        out_ref[:, b:b + 1] = col


@jax.jit
def pronet_forward(x, params):
    # x: (B, 1, NC, NT) float32, NCHW as in PyTorch
    xpad = jnp.pad(x[:, 0], ((0, 0), (0, 0), (PAD, PAD)))      # (B, NC, NTP)
    xaug = jnp.concatenate(
        [xpad.reshape(B * NC, NTP), jnp.ones((B * NC, 1), jnp.float32)], axis=1)

    logits_t = pl.pallas_call(
        pronet_kernel,
        out_shape=jax.ShapeDtypeStruct((CLASSES, B), jnp.float32),
        in_specs=[pl.BlockSpec(memory_space=pltpu.MemorySpace.VMEM)
                  for _ in range(10)],
        out_specs=pl.BlockSpec(memory_space=pltpu.MemorySpace.VMEM),
    )(xaug, params["t0_aug"], params["w2bd"], params["sh2_col"],
      params["p1bd"], params["w4s"], params["sh3_col"],
      params["p2"], params["wfc_stack"], params["fcb_col"])
    return logits_t.T                                          # (B, CLASSES)


# ---------------------------------------------------------------------------
# Parameters (deterministic synthetic init) + host-side weight folding
# ---------------------------------------------------------------------------
def init_params(key):
    ks = jax.random.split(key, 22)
    it = iter(ks)

    def nxt():
        return next(it)

    wi1 = 0.15 * jax.random.normal(nxt(), (F1, IK1), jnp.float32)
    wi2 = 0.15 * jax.random.normal(nxt(), (F1, IK2), jnp.float32)
    wi3 = 0.15 * jax.random.normal(nxt(), (F1, IK3), jnp.float32)
    bi1 = 0.05 * jax.random.normal(nxt(), (F1,), jnp.float32)
    bi2 = 0.05 * jax.random.normal(nxt(), (F1,), jnp.float32)
    bi3 = 0.05 * jax.random.normal(nxt(), (F1,), jnp.float32)
    w2 = 0.3 * jax.random.normal(nxt(), (F1, D, NC), jnp.float32)
    w4 = 0.3 * jax.random.normal(nxt(), (F2, C2), jnp.float32)
    wfc = 0.2 * jax.random.normal(nxt(), (CLASSES, F2 * T2), jnp.float32)
    bfc = 0.1 * jax.random.normal(nxt(), (CLASSES,), jnp.float32)

    def bn(n):
        g = 1.0 + 0.1 * jax.random.normal(nxt(), (n,), jnp.float32)
        beta = 0.1 * jax.random.normal(nxt(), (n,), jnp.float32)
        m = 0.1 * jax.random.normal(nxt(), (n,), jnp.float32)
        v = 1.0 + 0.1 * jax.random.uniform(nxt(), (n,), jnp.float32)
        s = g / jnp.sqrt(v + BN_EPS)
        return s, beta - m * s

    s0, sh0 = bn(F1)
    s2, sh2 = bn(C2)
    s3, sh3 = bn(F2)

    # combined Inception kernel (all odd widths, centered == 'same' padding)
    w_eff = wi1
    w_eff = w_eff.at[:, (IK1 - IK2) // 2:(IK1 - IK2) // 2 + IK2].add(wi2)
    w_eff = w_eff.at[:, (IK1 - IK3) // 2:(IK1 - IK3) // 2 + IK3].add(wi3)
    bias0 = bi1 + bi2 + bi3

    # Toeplitz conv0 weight with BN0 scale folded; biases + BN0 shift as ones-row
    p_idx = jnp.arange(NTP)[:, None]
    t_idx = jnp.arange(NT)[None, :]
    j = p_idx - t_idx
    valid = (j >= 0) & (j < IK1)
    jc = jnp.clip(j, 0, IK1 - 1)
    toep = jnp.where(valid[None, :, :], w_eff[:, jc], 0.0)        # (F1, NTP, NT)
    toep = toep * s0[:, None, None]
    t0 = jnp.transpose(toep, (1, 0, 2)).reshape(NTP, F1 * NT)
    bias_row = jnp.repeat(s0 * bias0 + sh0, NT)[None, :]          # (1, F1*NT)
    t0_aug = jnp.concatenate([t0, bias_row], axis=0)              # (NTP+1, F1*NT)

    # block-diagonal grouped-conv weight with BN2 scale folded
    w2s = w2 * s2.reshape(F1, D, 1)
    w2bd = jnp.zeros((C2, F1 * NC), jnp.float32)
    for f in range(F1):
        w2bd = w2bd.at[f * D:(f + 1) * D, f * NC:(f + 1) * NC].set(w2s[f])

    # pooling matrices (pool1 block-diag over batch; pool2 per-batch)
    p1 = (jnp.arange(NT)[:, None] // 4 == jnp.arange(T1)[None, :]
          ).astype(jnp.float32) / 4.0
    p1bd = jnp.kron(jnp.eye(B, dtype=jnp.float32), p1)            # (B*NT, B*T1)
    p2 = (jnp.arange(T1)[:, None] // 8 == jnp.arange(T2)[None, :]
          ).astype(jnp.float32) / 8.0

    # 1x1 conv4 with BN3 scale folded
    w4s = w4 * s3[:, None]

    # fc weight regrouped per pool2 time index: [t2*CLASSES + k, o] = wfc[k, o*T2 + t2]
    wfc_stack = jnp.transpose(
        wfc.reshape(CLASSES, F2, T2), (2, 0, 1)).reshape(T2 * CLASSES, F2)

    return dict(
        # raw parameters (used by the pure-JAX reference)
        wi1=wi1, wi2=wi2, wi3=wi3, bi1=bi1, bi2=bi2, bi3=bi3,
        w2=w2, w4=w4, wfc=wfc, bfc=bfc,
        s0=s0, sh0=sh0, s2=s2, sh2=sh2, s3=s3, sh3=sh3,
        # kernel operands (BN folded, matmul-friendly layouts)
        t0_aug=t0_aug, w2bd=w2bd, sh2_col=sh2.reshape(C2, 1),
        p1bd=p1bd, w4s=w4s, sh3_col=sh3.reshape(F2, 1),
        p2=p2, wfc_stack=wfc_stack, fcb_col=bfc.reshape(CLASSES, 1),
    )


# ---------------------------------------------------------------------------
# Pure-JAX reference (same semantics) used only for a correctness check
# ---------------------------------------------------------------------------
def reference_forward(x, params):
    def tconv(w, k):
        wf = w.reshape(F1, 1, 1, k)
        return lax.conv_general_dilated(
            x, wf, (1, 1), [(0, 0), (k // 2, k // 2)],
            dimension_numbers=("NCHW", "OIHW", "NCHW"))

    y = (tconv(params["wi1"], IK1) + params["bi1"].reshape(1, F1, 1, 1)
         + tconv(params["wi2"], IK2) + params["bi2"].reshape(1, F1, 1, 1)
         + tconv(params["wi3"], IK3) + params["bi3"].reshape(1, F1, 1, 1))
    y = y * params["s0"].reshape(1, F1, 1, 1) + params["sh0"].reshape(1, F1, 1, 1)
    # WTConv2d: identity (see TODO); re1/re2 cancel out.
    w2_oihw = params["w2"].reshape(C2, 1, NC, 1)
    y = lax.conv_general_dilated(y, w2_oihw, (1, 1), "VALID",
                                 dimension_numbers=("NCHW", "OIHW", "NCHW"),
                                 feature_group_count=F1)
    y = y * params["s2"].reshape(1, C2, 1, 1) + params["sh2"].reshape(1, C2, 1, 1)
    y = jnp.where(y > 0.0, y, jnp.exp(jnp.minimum(y, 0.0)) - 1.0)     # ELU
    y = y.reshape(B, C2, 1, T1, 4).mean(-1)                            # AvgPool(1,4)
    y = jnp.einsum("oc,bcht->boht", params["w4"], y)
    y = y * params["s3"].reshape(1, F2, 1, 1) + params["sh3"].reshape(1, F2, 1, 1)
    y = jnp.where(y > 0.0, y, jnp.exp(jnp.minimum(y, 0.0)) - 1.0)     # ELU
    y = y.reshape(B, F2, 1, T2, 8).mean(-1)                            # AvgPool(1,8)
    y = y.reshape(B, -1)
    return y @ params["wfc"].T + params["bfc"]


if __name__ == "__main__":
    key = jax.random.PRNGKey(0)
    kx, kp = jax.random.split(key)
    x = jax.random.normal(kx, (B, 1, NC, NT), jnp.float32)
    params = init_params(kp)

    logits = pronet_forward(x, params)
    logits = jax.block_until_ready(logits)
    assert logits.shape == (B, CLASSES)

    ref = reference_forward(x, params)
    err = float(jnp.max(jnp.abs(logits - ref)))
    if err < 2e-3:
        print("KERNEL_OK")
    else:
        print(f"MISMATCH max_abs_err={err}")
</pallas_src>

<mosaic_0001>
module attributes {stable_mosaic.version = 11 : i64} {
  func.func @pronet_kernel(%arg0: memref<16x79xf32, #tpu.memory_space<vmem>>, %arg1: memref<79x512xf32, #tpu.memory_space<vmem>>, %arg2: memref<16x64xf32, #tpu.memory_space<vmem>>, %arg3: memref<16x1xf32, #tpu.memory_space<vmem>>, %arg4: memref<128x32xf32, #tpu.memory_space<vmem>>, %arg5: memref<16x16xf32, #tpu.memory_space<vmem>>, %arg6: memref<16x1xf32, #tpu.memory_space<vmem>>, %arg7: memref<16x2xf32, #tpu.memory_space<vmem>>, %arg8: memref<16x16xf32, #tpu.memory_space<vmem>>, %arg9: memref<8x1xf32, #tpu.memory_space<vmem>>, %arg10: memref<8x2xf32, #tpu.memory_space<vmem>>) attributes {dimension_semantics = [], scalar_prefetch = 0 : i64, scratch_operands = 0 : i64, tpu.core_type = #tpu.core_type<tc>} {
    %c0 = arith.constant 0 : index
    %c0_0 = arith.constant 0 : index
    %0 = vector.load %arg0[%c0, %c0_0] : memref<16x79xf32, #tpu.memory_space<vmem>>, vector<16x79xf32>
    %c0_1 = arith.constant 0 : index
    %c0_2 = arith.constant 0 : index
    %1 = vector.load %arg1[%c0_1, %c0_2] : memref<79x512xf32, #tpu.memory_space<vmem>>, vector<79x512xf32>
    %cst = arith.constant dense<0.000000e+00> : vector<16x512xf32>
    %2 = tpu.matmul %0, %1, %cst {dimension_numbers = #tpu.dot_dimension_numbers<[1], [0], [0], [1], [0, 0, 1, 1], [], []>} : vector<16x79xf32>, vector<79x512xf32>, vector<16x512xf32> -> vector<16x512xf32>
    %3 = vector.extract_strided_slice %2 {offsets = [0, 0], sizes = [8, 64], strides = [1, 1]} : vector<16x512xf32> to vector<8x64xf32>
    %4 = vector.extract_strided_slice %2 {offsets = [8, 0], sizes = [8, 64], strides = [1, 1]} : vector<16x512xf32> to vector<8x64xf32>
    %5 = tpu.concatenate %3, %4 in 1 : vector<8x64xf32>, vector<8x64xf32> -> vector<8x128xf32>
    %6 = vector.extract_strided_slice %2 {offsets = [0, 64], sizes = [8, 64], strides = [1, 1]} : vector<16x512xf32> to vector<8x64xf32>
    %7 = vector.extract_strided_slice %2 {offsets = [8, 64], sizes = [8, 64], strides = [1, 1]} : vector<16x512xf32> to vector<8x64xf32>
    %8 = tpu.concatenate %6, %7 in 1 : vector<8x64xf32>, vector<8x64xf32> -> vector<8x128xf32>
    %9 = vector.extract_strided_slice %2 {offsets = [0, 128], sizes = [8, 64], strides = [1, 1]} : vector<16x512xf32> to vector<8x64xf32>
    %10 = vector.extract_strided_slice %2 {offsets = [8, 128], sizes = [8, 64], strides = [1, 1]} : vector<16x512xf32> to vector<8x64xf32>
    %11 = tpu.concatenate %9, %10 in 1 : vector<8x64xf32>, vector<8x64xf32> -> vector<8x128xf32>
    %12 = vector.extract_strided_slice %2 {offsets = [0, 192], sizes = [8, 64], strides = [1, 1]} : vector<16x512xf32> to vector<8x64xf32>
    %13 = vector.extract_strided_slice %2 {offsets = [8, 192], sizes = [8, 64], strides = [1, 1]} : vector<16x512xf32> to vector<8x64xf32>
    %14 = tpu.concatenate %12, %13 in 1 : vector<8x64xf32>, vector<8x64xf32> -> vector<8x128xf32>
    %15 = vector.extract_strided_slice %2 {offsets = [0, 256], sizes = [8, 64], strides = [1, 1]} : vector<16x512xf32> to vector<8x64xf32>
    %16 = vector.extract_strided_slice %2 {offsets = [8, 256], sizes = [8, 64], strides = [1, 1]} : vector<16x512xf32> to vector<8x64xf32>
    %17 = tpu.concatenate %15, %16 in 1 : vector<8x64xf32>, vector<8x64xf32> -> vector<8x128xf32>
    %18 = vector.extract_strided_slice %2 {offsets = [0, 320], sizes = [8, 64], strides = [1, 1]} : vector<16x512xf32> to vector<8x64xf32>
    %19 = vector.extract_strided_slice %2 {offsets = [8, 320], sizes = [8, 64], strides = [1, 1]} : vector<16x512xf32> to vector<8x64xf32>
    %20 = tpu.concatenate %18, %19 in 1 : vector<8x64xf32>, vector<8x64xf32> -> vector<8x128xf32>
    %21 = vector.extract_strided_slice %2 {offsets = [0, 384], sizes = [8, 64], strides = [1, 1]} : vector<16x512xf32> to vector<8x64xf32>
    %22 = vector.extract_strided_slice %2 {offsets = [8, 384], sizes = [8, 64], strides = [1, 1]} : vector<16x512xf32> to vector<8x64xf32>
    %23 = tpu.concatenate %21, %22 in 1 : vector<8x64xf32>, vector<8x64xf32> -> vector<8x128xf32>
    %24 = vector.extract_strided_slice %2 {offsets = [0, 448], sizes = [8, 64], strides = [1, 1]} : vector<16x512xf32> to vector<8x64xf32>
    %25 = vector.extract_strided_slice %2 {offsets = [8, 448], sizes = [8, 64], strides = [1, 1]} : vector<16x512xf32> to vector<8x64xf32>
    %26 = tpu.concatenate %24, %25 in 1 : vector<8x64xf32>, vector<8x64xf32> -> vector<8x128xf32>
    %27 = tpu.concatenate %5, %8, %11, %14, %17, %20, %23, %26 in 0 : vector<8x128xf32>, vector<8x128xf32>, vector<8x128xf32>, vector<8x128xf32>, vector<8x128xf32>, vector<8x128xf32>, vector<8x128xf32>, vector<8x128xf32> -> vector<64x128xf32>
    %c0_3 = arith.constant 0 : index
    %c0_4 = arith.constant 0 : index
    %28 = vector.load %arg2[%c0_3, %c0_4] : memref<16x64xf32, #tpu.memory_space<vmem>>, vector<16x64xf32>
    %cst_5 = arith.constant dense<0.000000e+00> : vector<16x128xf32>
    %29 = tpu.matmul %28, %27, %cst_5 {dimension_numbers = #tpu.dot_dimension_numbers<[1], [0], [0], [1], [0, 0, 1, 1], [], []>} : vector<16x64xf32>, vector<64x128xf32>, vector<16x128xf32> -> vector<16x128xf32>
    %c0_6 = arith.constant 0 : index
    %c0_7 = arith.constant 0 : index
    %30 = vector.load %arg3[%c0_6, %c0_7] : memref<16x1xf32, #tpu.memory_space<vmem>>, vector<16x1xf32>
    %31 = vector.broadcast %30 : vector<16x1xf32> to vector<16x128xf32>
    %32 = arith.addf %29, %31 : vector<16x128xf32>
    %cst_8 = arith.constant 0.000000e+00 : f32
    %33 = vector.broadcast %cst_8 : f32 to vector<16x128xf32>
    %34 = arith.cmpf ogt, %32, %33 : vector<16x128xf32>
    %cst_9 = arith.constant 0.000000e+00 : f32
    %35 = vector.broadcast %cst_9 : f32 to vector<16x128xf32>
    %36 = arith.minimumf %32, %35 : vector<16x128xf32>
    %37 = math.exp %36 : vector<16x128xf32>
    %cst_10 = arith.constant 1.000000e+00 : f32
    %38 = vector.broadcast %cst_10 : f32 to vector<16x128xf32>
    %39 = arith.subf %37, %38 : vector<16x128xf32>
    %40 = arith.select %34, %32, %39 : vector<16x128xi1>, vector<16x128xf32>
    %c0_11 = arith.constant 0 : index
    %c0_12 = arith.constant 0 : index
    %41 = vector.load %arg4[%c0_11, %c0_12] : memref<128x32xf32, #tpu.memory_space<vmem>>, vector<128x32xf32>
    %cst_13 = arith.constant dense<0.000000e+00> : vector<16x32xf32>
    %42 = tpu.matmul %40, %41, %cst_13 {dimension_numbers = #tpu.dot_dimension_numbers<[1], [0], [0], [1], [0, 0, 1, 1], [], []>} : vector<16x128xf32>, vector<128x32xf32>, vector<16x32xf32> -> vector<16x32xf32>
    %c0_14 = arith.constant 0 : index
    %c0_15 = arith.constant 0 : index
    %43 = vector.load %arg5[%c0_14, %c0_15] : memref<16x16xf32, #tpu.memory_space<vmem>>, vector<16x16xf32>
    %cst_16 = arith.constant dense<0.000000e+00> : vector<16x32xf32>
    %44 = tpu.matmul %43, %42, %cst_16 {dimension_numbers = #tpu.dot_dimension_numbers<[1], [0], [0], [1], [0, 0, 1, 1], [], []>} : vector<16x16xf32>, vector<16x32xf32>, vector<16x32xf32> -> vector<16x32xf32>
    %c0_17 = arith.constant 0 : index
    %c0_18 = arith.constant 0 : index
    %45 = vector.load %arg6[%c0_17, %c0_18] : memref<16x1xf32, #tpu.memory_space<vmem>>, vector<16x1xf32>
    %46 = vector.broadcast %45 : vector<16x1xf32> to vector<16x32xf32>
    %47 = arith.addf %44, %46 : vector<16x32xf32>
    %cst_19 = arith.constant 0.000000e+00 : f32
    %48 = vector.broadcast %cst_19 : f32 to vector<16x32xf32>
    %49 = arith.cmpf ogt, %47, %48 : vector<16x32xf32>
    %cst_20 = arith.constant 0.000000e+00 : f32
    %50 = vector.broadcast %cst_20 : f32 to vector<16x32xf32>
    %51 = arith.minimumf %47, %50 : vector<16x32xf32>
    %52 = math.exp %51 : vector<16x32xf32>
    %cst_21 = arith.constant 1.000000e+00 : f32
    %53 = vector.broadcast %cst_21 : f32 to vector<16x32xf32>
    %54 = arith.subf %52, %53 : vector<16x32xf32>
    %55 = arith.select %49, %47, %54 : vector<16x32xi1>, vector<16x32xf32>
    %56 = vector.extract_strided_slice %55 {offsets = [0, 0], sizes = [16, 16], strides = [1, 1]} : vector<16x32xf32> to vector<16x16xf32>
    %c0_22 = arith.constant 0 : index
    %c0_23 = arith.constant 0 : index
    %57 = vector.load %arg7[%c0_22, %c0_23] : memref<16x2xf32, #tpu.memory_space<vmem>>, vector<16x2xf32>
    %cst_24 = arith.constant dense<0.000000e+00> : vector<16x2xf32>
    %58 = tpu.matmul %56, %57, %cst_24 {dimension_numbers = #tpu.dot_dimension_numbers<[1], [0], [0], [1], [0, 0, 1, 1], [], []>} : vector<16x16xf32>, vector<16x2xf32>, vector<16x2xf32> -> vector<16x2xf32>
    %c0_25 = arith.constant 0 : index
    %c0_26 = arith.constant 0 : index
    %59 = vector.load %arg8[%c0_25, %c0_26] : memref<16x16xf32, #tpu.memory_space<vmem>>, vector<16x16xf32>
    %cst_27 = arith.constant dense<0.000000e+00> : vector<16x2xf32>
    %60 = tpu.matmul %59, %58, %cst_27 {dimension_numbers = #tpu.dot_dimension_numbers<[1], [0], [0], [1], [0, 0, 1, 1], [], []>} : vector<16x16xf32>, vector<16x2xf32>, vector<16x2xf32> -> vector<16x2xf32>
    %c0_28 = arith.constant 0 : index
    %c0_29 = arith.constant 0 : index
    %61 = vector.load %arg9[%c0_28, %c0_29] : memref<8x1xf32, #tpu.memory_space<vmem>>, vector<8x1xf32>
    %62 = vector.extract_strided_slice %60 {offsets = [0, 0], sizes = [8, 1], strides = [1, 1]} : vector<16x2xf32> to vector<8x1xf32>
    %63 = arith.addf %61, %62 : vector<8x1xf32>
    %64 = vector.extract_strided_slice %60 {offsets = [8, 1], sizes = [8, 1], strides = [1, 1]} : vector<16x2xf32> to vector<8x1xf32>
    %65 = arith.addf %63, %64 : vector<8x1xf32>
    %c0_30 = arith.constant 0 : index
    %c0_31 = arith.constant 0 : index
    %66 = vector.load %arg10[%c0_30, %c0_31] : memref<8x2xf32, #tpu.memory_space<vmem>>, vector<8x1xf32>
    tpu.vector_store %arg10[%c0_30, %c0_31], %65 {strides = array<i32>} : memref<8x2xf32, #tpu.memory_space<vmem>>, vector<8x1xf32>,
    %67 = vector.extract_strided_slice %55 {offsets = [0, 16], sizes = [16, 16], strides = [1, 1]} : vector<16x32xf32> to vector<16x16xf32>
    %c0_32 = arith.constant 0 : index
    %c0_33 = arith.constant 0 : index
    %68 = vector.load %arg7[%c0_32, %c0_33] : memref<16x2xf32, #tpu.memory_space<vmem>>, vector<16x2xf32>
    %cst_34 = arith.constant dense<0.000000e+00> : vector<16x2xf32>
    %69 = tpu.matmul %67, %68, %cst_34 {dimension_numbers = #tpu.dot_dimension_numbers<[1], [0], [0], [1], [0, 0, 1, 1], [], []>} : vector<16x16xf32>, vector<16x2xf32>, vector<16x2xf32> -> vector<16x2xf32>
    %c0_35 = arith.constant 0 : index
    %c0_36 = arith.constant 0 : index
    %70 = vector.load %arg8[%c0_35, %c0_36] : memref<16x16xf32, #tpu.memory_space<vmem>>, vector<16x16xf32>
    %cst_37 = arith.constant dense<0.000000e+00> : vector<16x2xf32>
    %71 = tpu.matmul %70, %69, %cst_37 {dimension_numbers = #tpu.dot_dimension_numbers<[1], [0], [0], [1], [0, 0, 1, 1], [], []>} : vector<16x16xf32>, vector<16x2xf32>, vector<16x2xf32> -> vector<16x2xf32>
    %c0_38 = arith.constant 0 : index
    %c0_39 = arith.constant 0 : index
    %72 = vector.load %arg9[%c0_38, %c0_39] : memref<8x1xf32, #tpu.memory_space<vmem>>, vector<8x1xf32>
    %73 = vector.extract_strided_slice %71 {offsets = [0, 0], sizes = [8, 1], strides = [1, 1]} : vector<16x2xf32> to vector<8x1xf32>
    %74 = arith.addf %72, %73 : vector<8x1xf32>
    %75 = vector.extract_strided_slice %71 {offsets = [8, 1], sizes = [8, 1], strides = [1, 1]} : vector<16x2xf32> to vector<8x1xf32>
    %76 = arith.addf %74, %75 : vector<8x1xf32>
    %c0_40 = arith.constant 0 : index
    %c1 = arith.constant 1 : index
    %77 = vector.load %arg10[%c0_40, %c1] : memref<8x2xf32, #tpu.memory_space<vmem>>, vector<8x1xf32>
    tpu.vector_store %arg10[%c0_40, %c1], %76 {strides = array<i32>} : memref<8x2xf32, #tpu.memory_space<vmem>>, vector<8x1xf32>,
    return
  }
}

</mosaic_0001>

<llo_original>
// kernel: pronet_forward.1
$region0: #{pronet_forward.1}
  #allocation0 [shape = 'u32[]', space=smem, size = 0x4, offset = 0x4, fixed_abs, tag = 'smem constant byte address 0x4 - core index']
  #allocation1 [shape = 'u32[144,128]{1,0:T(1,128)}', space=vmem, size = 0x12000, scoped, tag = 'internal scratch']
  %s0 = inlined_call_operand.vmem [shape: f32[16,79], index: 0, kind: input, shape index: {}]
  %s1 = inlined_call_operand.hbm [shape: f32[79,512], index: 1, kind: input, shape index: {}]
  %s2 = inlined_call_operand.vmem [shape: f32[16,64], index: 2, kind: input, shape index: {}]
  %s3 = inlined_call_operand.vmem [shape: f32[16,1], index: 3, kind: input, shape index: {}]
  %s4 = inlined_call_operand.vmem [shape: f32[128,32], index: 4, kind: input, shape index: {}]
  %s5 = inlined_call_operand.vmem [shape: f32[16,16], index: 5, kind: input, shape index: {}]
  %s6 = inlined_call_operand.vmem [shape: f32[16,1], index: 6, kind: input, shape index: {}]
  %s7 = inlined_call_operand.vmem [shape: f32[16,2], index: 7, kind: input, shape index: {}]
  %s8 = inlined_call_operand.vmem [shape: f32[16,16], index: 8, kind: input, shape index: {}]
  %s9 = inlined_call_operand.vmem [shape: f32[8,1], index: 9, kind: input, shape index: {}]
  %s10 = inlined_call_operand.vmem [shape: f32[8,2], index: 10, kind: output, shape index: {}]
  %s11 = sld [smem:[#allocation0]]
  $region54: #{pronet_forward.1} parent=0
    _
  %s13 = ssub.s32 1, %s11
  %s14 = scalar_select 0, %s13, %s11
  $region1: #{pronet_forward.1} parent=0
    #allocation2 [shape = 'u8[163840]{0}', space=vmem, size = 0x28000, scoped, tag = 'input window, operand 1, single buffered']
    #allocation3 [shape = 's32[1]{0}', space=sflag, size = 0x4, scoped, tag = 'scoped memory for pronet_forward.1']
    %15 = vsyncpa [#allocation3], 0
    // Predicated region
    $region2: #{pronet_forward.1} parent=1 // pred_check
      _
    $region3: #{pronet_forward.1} parent=1 // pred_check_branch
      %17 = sbr.rel (0) target = $region5
    $region4: #{pronet_forward.1} parent=1 // pred_region
      _
    $region5: #{pronet_forward.1} parent=1 // pred_fallthru
      _
    // Predicated region
    $region6: #{pronet_forward.1} parent=1 // pred_check
      _
    $region7: #{pronet_forward.1} parent=1 // pred_check_branch
      %19 = sbr.rel (0) target = $region9
    $region8: #{pronet_forward.1} parent=1 // pred_region
      %s21 = ssub.s32 5120, 5120
      %22 = vsyncadd [#allocation3], %s21
      %s23 = sshll.u32 [#allocation2], 4
      %s24 = int_to_ptr.vmem [resolvable:$true] %s23
      %29 = dma.hbm_to_vmem [thread:$0]  %s1, 5120, %s24, [#allocation3], 512, 512, 32
    $region9: #{pronet_forward.1} parent=1 // pred_fallthru
      _
    // Predicated region
    $region10: #{pronet_forward.1} parent=1 // pred_check
      _
    $region11: #{pronet_forward.1} parent=1 // pred_check_branch
      %31 = sbr.rel (0) target = $region13
    $region12: #{pronet_forward.1} parent=1 // pred_region
      _
    $region13: #{pronet_forward.1} parent=1 // pred_fallthru
      _
    // Predicated region
    $region14: #{pronet_forward.1} parent=1 // pred_check
      _
    $region15: #{pronet_forward.1} parent=1 // pred_check_branch
      %33 = sbr.rel (0) target = $region17
    $region16: #{pronet_forward.1} parent=1 // pred_region
      _
    $region17: #{pronet_forward.1} parent=1 // pred_fallthru
      _
    // Predicated region
    $region18: #{pronet_forward.1} parent=1 // pred_check
      _
    $region19: #{pronet_forward.1} parent=1 // pred_check_branch
      %35 = sbr.rel (0) target = $region21
    $region20: #{pronet_forward.1} parent=1 // pred_region
      _
    $region21: #{pronet_forward.1} parent=1 // pred_fallthru
      _
    // Predicated region
    $region22: #{pronet_forward.1} parent=1 // pred_check
      _
    $region23: #{pronet_forward.1} parent=1 // pred_check_branch
      %37 = sbr.rel (0) target = $region25
    $region24: #{pronet_forward.1} parent=1 // pred_region
      _
    $region25: #{pronet_forward.1} parent=1 // pred_fallthru
      _
    // Predicated region
    $region26: #{pronet_forward.1} parent=1 // pred_check
      _
    $region27: #{pronet_forward.1} parent=1 // pred_check_branch
      %39 = sbr.rel (0) target = $region29
    $region28: #{pronet_forward.1} parent=1 // pred_region
      _
    $region29: #{pronet_forward.1} parent=1 // pred_fallthru
      _
    // Predicated region
    $region30: #{pronet_forward.1} parent=1 // pred_check
      _
    $region31: #{pronet_forward.1} parent=1 // pred_check_branch
      %41 = sbr.rel (0) target = $region33
    $region32: #{pronet_forward.1} parent=1 // pred_region
      _
    $region33: #{pronet_forward.1} parent=1 // pred_fallthru
      _
    // Predicated region
    $region34: #{pronet_forward.1} parent=1 // pred_check
      _
    $region35: #{pronet_forward.1} parent=1 // pred_check_branch
      %43 = sbr.rel (0) target = $region37
    $region36: #{pronet_forward.1} parent=1 // pred_region
      _
    $region37: #{pronet_forward.1} parent=1 // pred_fallthru
      _
    // Predicated region
    $region38: #{pronet_forward.1} parent=1 // pred_check
      _
    $region39: #{pronet_forward.1} parent=1 // pred_check_branch
      %45 = sbr.rel (0) target = $region41
    $region40: #{pronet_forward.1} parent=1 // pred_region
      _
    $region41: #{pronet_forward.1} parent=1 // pred_fallthru
      _
    // Predicated region
    $region42: #{pronet_forward.1} parent=1 // pred_check
      _
    $region43: #{pronet_forward.1} parent=1 // pred_check_branch
      %47 = sbr.rel (0) target = $region45
    $region44: #{pronet_forward.1} parent=1 // pred_region
      %48 = dma.done [#allocation3], 5120
    $region45: #{pronet_forward.1} parent=1 // pred_fallthru
      _
    %v49 = vld [vmem:[%s0] sm:$0xff]
    %v50 = vld [vmem:[%s0 + $0x8] sm:$0xff]
    %v51 = vld [vmem:[#allocation2] sm:$0xff]
    %v52 = vld [vmem:[#allocation2 + $0x8] sm:$0xff]
    %v53 = vld [vmem:[#allocation2 + $0x10] sm:$0xff]
    %v54 = vld [vmem:[#allocation2 + $0x18] sm:$0xff]
    %v55 = vld [vmem:[#allocation2 + $0x20] sm:$0xff]
    %v56 = vld [vmem:[#allocation2 + $0x28] sm:$0xff]
    %v57 = vld [vmem:[#allocation2 + $0x30] sm:$0xff]
    %v58 = vld [vmem:[#allocation2 + $0x38] sm:$0xff]
    %v59 = vld [vmem:[#allocation2 + $0x40] sm:$0xff]
    %v60 = vld [vmem:[#allocation2 + $0x48] sm:$0xff]
    %v61 = vld [vmem:[#allocation2 + $0x50] sm:$0xff]
    %v62 = vld [vmem:[#allocation2 + $0x58] sm:$0xff]
    %v63 = vld [vmem:[#allocation2 + $0x60] sm:$0xff]
    %v64 = vld [vmem:[#allocation2 + $0x68] sm:$0xff]
    %v65 = vld [vmem:[#allocation2 + $0x70] sm:$0xff]
    %v66 = vld [vmem:[#allocation2 + $0x78] sm:$0xff]
    %v67 = vld [vmem:[#allocation2 + $0x80] sm:$0xff]
    %v68 = vld [vmem:[#allocation2 + $0x88] sm:$0xff]
    %v69 = vld [vmem:[#allocation2 + $0x90] sm:$0xff]
    %v70 = vld [vmem:[#allocation2 + $0x98] sm:$0xff]
    %v71 = vld [vmem:[#allocation2 + $0xa0] sm:$0xff]
    %v72 = vld [vmem:[#allocation2 + $0xa8] sm:$0xff]
    %v73 = vld [vmem:[#allocation2 + $0xb0] sm:$0xff]
    %v74 = vld [vmem:[#allocation2 + $0xb8] sm:$0xff]
    %v75 = vld [vmem:[#allocation2 + $0xc0] sm:$0xff]
    %v76 = vld [vmem:[#allocation2 + $0xc8] sm:$0xff]
    %v77 = vld [vmem:[#allocation2 + $0xd0] sm:$0xff]
    %v78 = vld [vmem:[#allocation2 + $0xd8] sm:$0xff]
    %v79 = vld [vmem:[#allocation2 + $0xe0] sm:$0xff]
    %v80 = vld [vmem:[#allocation2 + $0xe8] sm:$0xff]
    %v81 = vld [vmem:[#allocation2 + $0xf0] sm:$0xff]
    %v82 = vld [vmem:[#allocation2 + $0xf8] sm:$0xff]
    %v83 = vld [vmem:[#allocation2 + $0x100] sm:$0xff]
    %v84 = vld [vmem:[#allocation2 + $0x108] sm:$0xff]
    %v85 = vld [vmem:[#allocation2 + $0x110] sm:$0xff]
    %v86 = vld [vmem:[#allocation2 + $0x118] sm:$0xff]
    %v87 = vld [vmem:[#allocation2 + $0x120] sm:$0x7f]
    %v88 = vld [vmem:[#allocation2 + $0x128] sm:$0x7f]
    %v89 = vld [vmem:[#allocation2 + $0x130] sm:$0x7f]
    %v90 = vld [vmem:[#allocation2 + $0x138] sm:$0x7f]
    %vm91 = vcmask 646144
    %v93 = vsel %vm91, %v49, 0
    %v96 = vsel %vm91, %v50, 0
    %vm98 = vcmask 1046528
    %v100 = vsel %vm98, %v87, 0
    %v103 = vsel %vm98, %v88, 0
    %v106 = vsel %vm98, %v89, 0
    %v109 = vsel %vm98, %v90, 0
    %111 = vmatprep.subr.mxu0 %v52
    %112 = vmatpush1.msra.mxu0 %v51
    %113 = vmatprep.subr.mxu0 %v56
    %114 = vmatpush1.msra.mxu0 %v55
    %115 = vmatprep.subr.mxu0 %v60
    %116 = vmatpush1.msra.mxu0 %v59
    %117 = vmatprep.subr.mxu0 %v64
    %118 = vmatpush1.msra.mxu0 %v63
    %119 = vmatprep.subr.mxu0 %v68
    %120 = vmatpush1.msra.mxu0 %v67
    %121 = vmatprep.subr.mxu0 %v72
    %122 = vmatpush1.msra.mxu0 %v71
    %123 = vmatprep.subr.mxu0 %v76
    %124 = vmatpush1.msra.mxu0 %v75
    %125 = vmatprep.subr.mxu0 %v80
    %126 = vmatpush1.msra.mxu0 %v79
    %127 = vmatprep.subr.mxu0 %v84
    %128 = vmatpush1.msra.mxu0 %v83
    %129 = vmatprep.subr.mxu0 %v103
    %130 = vmatpush1.msra.mxu0 %v100
    %131 = vmatprep.subr.mxu0 0.0
    %132 = vmatpush1.msra.mxu0 0.0
    %133 = vmatprep.subr.mxu0 0.0
    %134 = vmatpush1.msra.mxu0 0.0
    %135 = vmatprep.subr.mxu0 0.0
    %136 = vmatpush1.msra.mxu0 0.0
    %137 = vmatprep.subr.mxu0 0.0
    %138 = vmatpush1.msra.mxu0 0.0
    %139 = vmatprep.subr.mxu0 0.0
    %140 = vmatpush1.msra.mxu0 0.0
    %141 = vmatprep.subr.mxu0 0.0
    %142 = vmatpush1.msra.mxu0 0.0
    %143 = vmatprep.subr.mxu0 0.0
    %144 = vmatpush1.msra.mxu0 0.0
    %145 = vmatprep.subr.mxu0 0.0
    %146 = vmatpush1.msra.mxu0 0.0
    %147 = vmatprep.subr.mxu0 0.0
    %148 = vmatpush1.msra.mxu0 0.0
    %149 = vmatprep.subr.mxu0 0.0
    %150 = vmatpush1.msra.mxu0 0.0
    %151 = vmatprep.subr.mxu0 0.0
    %152 = vmatpush1.msra.mxu0 0.0
    %153 = vmatprep.subr.mxu0 0.0
    %154 = vmatpush1.msra.mxu0 0.0
    %155 = vmatprep.subr.mxu0 0.0
    %156 = vmatpush1.msra.mxu0 0.0
    %157 = vmatprep.subr.mxu0 0.0
    %158 = vmatpush1.msra.mxu0 0.0
    %159 = vmatprep.subr.mxu0 0.0
    %160 = vmatpush1.msra.mxu0 0.0
    %161 = vmatprep.subr.mxu0 0.0
    %162 = vmatpush1.msra.mxu0 0.0
    %163 = vmatprep.subr.mxu0 0.0
    %164 = vmatpush1.msra.mxu0 0.0
    %165 = vmatprep.subr.mxu0 0.0
    %166 = vmatpush1.msra.mxu0 0.0
    %167 = vmatprep.subr.mxu0 0.0
    %168 = vmatpush1.msra.mxu0 0.0
    %169 = vmatprep.subr.mxu0 0.0
    %170 = vmatpush1.msra.mxu0 0.0
    %171 = vmatprep.subr.mxu0 0.0
    %172 = vmatpush1.msra.mxu0 0.0
    %173 = vmatprep.subr.mxu0 0.0
    %174 = vmatpush1.msra.mxu0 0.0
    %175 = vmatprep.mubr.f32.mxu0 0.0
    %176 = vmatmul.mubr.f32.gmra.mrb[0].mxu0 %v93
    %v177 = vpop.f32.mrb[0].mxu0
    %v178 = vadd.f32 0.0, %v177
    %v179 = vpop.f32.mrb[0].mxu0
    %v180 = vadd.f32 0.0, %v179
    %181 = vmatprep.mubr.f32.mxu0 0.0
    %182 = vmatmul.mubr.f32.gmra.mrb[0].mxu0 %v96
    %v183 = vpop.f32.mrb[0].mxu0
    %v184 = vadd.f32 0.0, %v183
    %v185 = vpop.f32.mrb[0].mxu0
    %v186 = vadd.f32 0.0, %v185
    %187 = vdwg.mxu0
    %188 = vmatprep.subr.mxu0 %v54
    %189 = vmatpush1.msra.mxu0 %v53
    %190 = vmatprep.subr.mxu0 %v58
    %191 = vmatpush1.msra.mxu0 %v57
    %192 = vmatprep.subr.mxu0 %v62
    %193 = vmatpush1.msra.mxu0 %v61
    %194 = vmatprep.subr.mxu0 %v66
    %195 = vmatpush1.msra.mxu0 %v65
    %196 = vmatprep.subr.mxu0 %v70
    %197 = vmatpush1.msra.mxu0 %v69
    %198 = vmatprep.subr.mxu0 %v74
    %199 = vmatpush1.msra.mxu0 %v73
    %200 = vmatprep.subr.mxu0 %v78
    %201 = vmatpush1.msra.mxu0 %v77
    %202 = vmatprep.subr.mxu0 %v82
    %203 = vmatpush1.msra.mxu0 %v81
    %204 = vmatprep.subr.mxu0 %v86
    %205 = vmatpush1.msra.mxu0 %v85
    %206 = vmatprep.subr.mxu0 %v109
    %207 = vmatpush1.msra.mxu0 %v106
    %208 = vmatprep.subr.mxu0 0.0
    %209 = vmatpush1.msra.mxu0 0.0
    %210 = vmatprep.subr.mxu0 0.0
    %211 = vmatpush1.msra.mxu0 0.0
    %212 = vmatprep.subr.mxu0 0.0
    %213 = vmatpush1.msra.mxu0 0.0
    %214 = vmatprep.subr.mxu0 0.0
    %215 = vmatpush1.msra.mxu0 0.0
    %216 = vmatprep.subr.mxu0 0.0
    %217 = vmatpush1.msra.mxu0 0.0
    %218 = vmatprep.subr.mxu0 0.0
    %219 = vmatpush1.msra.mxu0 0.0
    %220 = vmatprep.subr.mxu0 0.0
    %221 = vmatpush1.msra.mxu0 0.0
    %222 = vmatprep.subr.mxu0 0.0
    %223 = vmatpush1.msra.mxu0 0.0
    %224 = vmatprep.subr.mxu0 0.0
    %225 = vmatpush1.msra.mxu0 0.0
    %226 = vmatprep.subr.mxu0 0.0
    %227 = vmatpush1.msra.mxu0 0.0
    %228 = vmatprep.subr.mxu0 0.0
    %229 = vmatpush1.msra.mxu0 0.0
    %230 = vmatprep.subr.mxu0 0.0
    %231 = vmatpush1.msra.mxu0 0.0
    %232 = vmatprep.subr.mxu0 0.0
    %233 = vmatpush1.msra.mxu0 0.0
    %234 = vmatprep.subr.mxu0 0.0
    %235 = vmatpush1.msra.mxu0 0.0
    %236 = vmatprep.subr.mxu0 0.0
    %237 = vmatpush1.msra.mxu0 0.0
    %238 = vmatprep.subr.mxu0 0.0
    %239 = vmatpush1.msra.mxu0 0.0
    %240 = vmatprep.subr.mxu0 0.0
    %241 = vmatpush1.msra.mxu0 0.0
    %242 = vmatprep.subr.mxu0 0.0
    %243 = vmatpush1.msra.mxu0 0.0
    %244 = vmatprep.subr.mxu0 0.0
    %245 = vmatpush1.msra.mxu0 0.0
    %246 = vmatprep.subr.mxu0 0.0
    %247 = vmatpush1.msra.mxu0 0.0
    %248 = vmatprep.subr.mxu0 0.0
    %249 = vmatpush1.msra.mxu0 0.0
    %250 = vmatprep.subr.mxu0 0.0
    %251 = vmatpush1.msra.mxu0 0.0
    %252 = vmatprep.mubr.f32.mxu0 0.0
    %253 = vmatmul.mubr.f32.gmra.mrb[0].mxu0 %v93
    %v254 = vpop.f32.mrb[0].mxu0
    %v255 = vadd.f32 0.0, %v254
    %v256 = vpop.f32.mrb[0].mxu0
    %v257 = vadd.f32 0.0, %v256
    %258 = vmatprep.mubr.f32.mxu0 0.0
    %259 = vmatmul.mubr.f32.gmra.mrb[0].mxu0 %v96
    %v260 = vpop.f32.mrb[0].mxu0
    %v261 = vadd.f32 0.0, %v260
    %v262 = vpop.f32.mrb[0].mxu0
    %v263 = vadd.f32 0.0, %v262
    %264 = vdwg.mxu0
    %266 = vrot.lane.b32.xlu0 %v184, 64
    %v267 = vpop.permute.xlu0 %266
    %vm269 = vcmask 523264
    %v270 = vsel %vm269, %v178, %v267
    %272 = vrot.lane.b32.xlu0 %v178, 64
    %v273 = vpop.permute.xlu0 %272
    %v275 = vsel %vm269, %v273, %v184
    %277 = vrot.lane.b32.xlu0 %v186, 64
    %v278 = vpop.permute.xlu0 %277
    %v280 = vsel %vm269, %v180, %v278
    %282 = vrot.lane.b32.xlu0 %v180, 64
    %v283 = vpop.permute.xlu0 %282
    %v285 = vsel %vm269, %v283, %v186
    %287 = vrot.lane.b32.xlu0 %v261, 64
    %v288 = vpop.permute.xlu0 %287
    %v290 = vsel %vm269, %v255, %v288
    %292 = vrot.lane.b32.xlu0 %v255, 64
    %v293 = vpop.permute.xlu0 %292
    %v295 = vsel %vm269, %v293, %v261
    %297 = vrot.lane.b32.xlu0 %v263, 64
    %v298 = vpop.permute.xlu0 %297
    %v300 = vsel %vm269, %v257, %v298
    %302 = vrot.lane.b32.xlu0 %v257, 64
    %v303 = vpop.permute.xlu0 %302
    %v305 = vsel %vm269, %v303, %v263
    %v306 = vld [vmem:[%s2] sm:$0xff]
    %v307 = vld [vmem:[%s2 + $0x8] sm:$0xff]
    %v308 = vld [vmem:[%s3] sm:$0xff]
    %v309 = vld [vmem:[%s3 + $0x8] sm:$0xff]
    %311 = vset.pattern.permute.xlu0 0
    %312 = vperm.xlu0 %311, %v308
    %v313 = vpop.permute.xlu0 %312
    %316 = vset.pattern.permute.xlu0 0
    %317 = vperm.xlu0 %316, %v309
    %v318 = vpop.permute.xlu0 %317
    %v321 = vsel %vm269, %v306, 0
    %v324 = vsel %vm269, %v307, 0
    %326 = vmatprep.subr.mxu0 0.0
    %327 = vmatpush1.msra.mxu0 %v270
    %328 = vmatprep.subr.mxu0 0.0
    %329 = vmatpush1.msra.mxu0 %v275
    %330 = vmatprep.subr.mxu0 0.0
    %331 = vmatpush1.msra.mxu0 %v280
    %332 = vmatprep.subr.mxu0 0.0
    %333 = vmatpush1.msra.mxu0 %v285
    %334 = vmatprep.subr.mxu0 0.0
    %335 = vmatpush1.msra.mxu0 %v290
    %336 = vmatprep.subr.mxu0 0.0
    %337 = vmatpush1.msra.mxu0 %v295
    %338 = vmatprep.subr.mxu0 0.0
    %339 = vmatpush1.msra.mxu0 %v300
    %340 = vmatprep.subr.mxu0 0.0
    %341 = vmatpush1.msra.mxu0 %v305
    %342 = vmatprep.subr.mxu0 0.0
    %343 = vmatpush1.msra.mxu0 0.0
    %344 = vmatprep.subr.mxu0 0.0
    %345 = vmatpush1.msra.mxu0 0.0
    %346 = vmatprep.subr.mxu0 0.0
    %347 = vmatpush1.msra.mxu0 0.0
    %348 = vmatprep.subr.mxu0 0.0
    %349 = vmatpush1.msra.mxu0 0.0
    %350 = vmatprep.subr.mxu0 0.0
    %351 = vmatpush1.msra.mxu0 0.0
    %352 = vmatprep.subr.mxu0 0.0
    %353 = vmatpush1.msra.mxu0 0.0
    %354 = vmatprep.subr.mxu0 0.0
    %355 = vmatpush1.msra.mxu0 0.0
    %356 = vmatprep.subr.mxu0 0.0
    %357 = vmatpush1.msra.mxu0 0.0
    %358 = vmatprep.subr.mxu0 0.0
    %359 = vmatpush1.msra.mxu0 0.0
    %360 = vmatprep.subr.mxu0 0.0
    %361 = vmatpush1.msra.mxu0 0.0
    %362 = vmatprep.subr.mxu0 0.0
    %363 = vmatpush1.msra.mxu0 0.0
    %364 = vmatprep.subr.mxu0 0.0
    %365 = vmatpush1.msra.mxu0 0.0
    %366 = vmatprep.subr.mxu0 0.0
    %367 = vmatpush1.msra.mxu0 0.0
    %368 = vmatprep.subr.mxu0 0.0
    %369 = vmatpush1.msra.mxu0 0.0
    %370 = vmatprep.subr.mxu0 0.0
    %371 = vmatpush1.msra.mxu0 0.0
    %372 = vmatprep.subr.mxu0 0.0
    %373 = vmatpush1.msra.mxu0 0.0
    %374 = vmatprep.subr.mxu0 0.0
    %375 = vmatpush1.msra.mxu0 0.0
    %376 = vmatprep.subr.mxu0 0.0
    %377 = vmatpush1.msra.mxu0 0.0
    %378 = vmatprep.subr.mxu0 0.0
    %379 = vmatpush1.msra.mxu0 0.0
    %380 = vmatprep.subr.mxu0 0.0
    %381 = vmatpush1.msra.mxu0 0.0
    %382 = vmatprep.subr.mxu0 0.0
    %383 = vmatpush1.msra.mxu0 0.0
    %384 = vmatprep.subr.mxu0 0.0
    %385 = vmatpush1.msra.mxu0 0.0
    %386 = vmatprep.subr.mxu0 0.0
    %387 = vmatpush1.msra.mxu0 0.0
    %388 = vmatprep.subr.mxu0 0.0
    %389 = vmatpush1.msra.mxu0 0.0
    %390 = vmatprep.mubr.f32.mxu0 0.0
    %391 = vmatmul.mubr.f32.gmra.mrb[0].mxu0 %v321
    %v392 = vpop.f32.mrb[0].mxu0
    %v393 = vadd.f32 %v313, %v392
    %v394 = vpop.f32.mrb[0].mxu0
    %395 = vmatprep.mubr.f32.mxu0 0.0
    %396 = vmatmul.mubr.f32.gmra.mrb[0].mxu0 %v324
    %v397 = vpop.f32.mrb[0].mxu0
    %v398 = vadd.f32 %v318, %v397
    %v399 = vpop.f32.mrb[0].mxu0
    %400 = vdwg.mxu0
    %vm401 = vcmp.gt.f32.partialorder %v393, 0.0
    %vm402 = vcmp.gt.f32.partialorder %v398, 0.0
    %v403 = vmin.f32 %v393, 0.0
    %v404 = vmin.f32 %v398, 0.0
    %v405 = vmul.f32 %v403, 1.442695
    %v406 = vpow.pop %v405
    %v407 = vmul.f32 %v404, 1.442695
    %v408 = vpow.pop %v407
    %v409 = vsub.f32 %v406, 1.0
    %v410 = vsub.f32 %v408, 1.0
    %v411 = vsel %vm401, %v393, %v409
    %v412 = vsel %vm402, %v398, %v410
    %v413 = vld [vmem:[%s4] sm:$0xff]
    %v414 = vld [vmem:[%s4 + $0x8] sm:$0xff]
    %v415 = vld [vmem:[%s4 + $0x10] sm:$0xff]
    %v416 = vld [vmem:[%s4 + $0x18] sm:$0xff]
    %v417 = vld [vmem:[%s4 + $0x20] sm:$0xff]
    %v418 = vld [vmem:[%s4 + $0x28] sm:$0xff]
    %v419 = vld [vmem:[%s4 + $0x30] sm:$0xff]
    %v420 = vld [vmem:[%s4 + $0x38] sm:$0xff]
    %v421 = vld [vmem:[%s4 + $0x40] sm:$0xff]
    %v422 = vld [vmem:[%s4 + $0x48] sm:$0xff]
    %v423 = vld [vmem:[%s4 + $0x50] sm:$0xff]
    %v424 = vld [vmem:[%s4 + $0x58] sm:$0xff]
    %v425 = vld [vmem:[%s4 + $0x60] sm:$0xff]
    %v426 = vld [vmem:[%s4 + $0x68] sm:$0xff]
    %v427 = vld [vmem:[%s4 + $0x70] sm:$0xff]
    %v428 = vld [vmem:[%s4 + $0x78] sm:$0xff]
    %429 = vmatprep.subr.mxu0 0.0
    %430 = vmatpush1.msra.mxu0 %v413
    %431 = vmatprep.subr.mxu0 0.0
    %432 = vmatpush1.msra.mxu0 %v414
    %433 = vmatprep.subr.mxu0 0.0
    %434 = vmatpush1.msra.mxu0 %v415
    %435 = vmatprep.subr.mxu0 0.0
    %436 = vmatpush1.msra.mxu0 %v416
    %437 = vmatprep.subr.mxu0 0.0
    %438 = vmatpush1.msra.mxu0 %v417
    %439 = vmatprep.subr.mxu0 0.0
    %440 = vmatpush1.msra.mxu0 %v418
    %441 = vmatprep.subr.mxu0 0.0
    %442 = vmatpush1.msra.mxu0 %v419
    %443 = vmatprep.subr.mxu0 0.0
    %444 = vmatpush1.msra.mxu0 %v420
    %445 = vmatprep.subr.mxu0 0.0
    %446 = vmatpush1.msra.mxu0 %v421
    %447 = vmatprep.subr.mxu0 0.0
    %448 = vmatpush1.msra.mxu0 %v422
    %449 = vmatprep.subr.mxu0 0.0
    %450 = vmatpush1.msra.mxu0 %v423
    %451 = vmatprep.subr.mxu0 0.0
    %452 = vmatpush1.msra.mxu0 %v424
    %453 = vmatprep.subr.mxu0 0.0
    %454 = vmatpush1.msra.mxu0 %v425
    %455 = vmatprep.subr.mxu0 0.0
    %456 = vmatpush1.msra.mxu0 %v426
    %457 = vmatprep.subr.mxu0 0.0
    %458 = vmatpush1.msra.mxu0 %v427
    %459 = vmatprep.subr.mxu0 0.0
    %460 = vmatpush1.msra.mxu0 %v428
    %461 = vmatprep.subr.mxu0 0.0
    %462 = vmatpush1.msra.mxu0 0.0
    %463 = vmatprep.subr.mxu0 0.0
    %464 = vmatpush1.msra.mxu0 0.0
    %465 = vmatprep.subr.mxu0 0.0
    %466 = vmatpush1.msra.mxu0 0.0
    %467 = vmatprep.subr.mxu0 0.0
    %468 = vmatpush1.msra.mxu0 0.0
    %469 = vmatprep.subr.mxu0 0.0
    %470 = vmatpush1.msra.mxu0 0.0
    %471 = vmatprep.subr.mxu0 0.0
    %472 = vmatpush1.msra.mxu0 0.0
    %473 = vmatprep.subr.mxu0 0.0
    %474 = vmatpush1.msra.mxu0 0.0
    %475 = vmatprep.subr.mxu0 0.0
    %476 = vmatpush1.msra.mxu0 0.0
    %477 = vmatprep.subr.mxu0 0.0
    %478 = vmatpush1.msra.mxu0 0.0
    %479 = vmatprep.subr.mxu0 0.0
    %480 = vmatpush1.msra.mxu0 0.0
    %481 = vmatprep.subr.mxu0 0.0
    %482 = vmatpush1.msra.mxu0 0.0
    %483 = vmatprep.subr.mxu0 0.0
    %484 = vmatpush1.msra.mxu0 0.0
    %485 = vmatprep.subr.mxu0 0.0
    %486 = vmatpush1.msra.mxu0 0.0
    %487 = vmatprep.subr.mxu0 0.0
    %488 = vmatpush1.msra.mxu0 0.0
    %489 = vmatprep.subr.mxu0 0.0
    %490 = vmatpush1.msra.mxu0 0.0
    %491 = vmatprep.subr.mxu0 0.0
    %492 = vmatpush1.msra.mxu0 0.0
    %493 = vmatprep.mubr.f32.mxu0 0.0
    %494 = vmatmul.mubr.f32.gmra.mrb[0].mxu0 %v411
    %v495 = vpop.f32.mrb[0].mxu0
    %v496 = vadd.f32 0.0, %v495
    %v497 = vpop.f32.mrb[0].mxu0
    %498 = vmatprep.mubr.f32.mxu0 0.0
    %499 = vmatmul.mubr.f32.gmra.mrb[0].mxu0 %v412
    %v500 = vpop.f32.mrb[0].mxu0
    %v501 = vadd.f32 0.0, %v500
    %v502 = vpop.f32.mrb[0].mxu0
    %503 = vdwg.mxu0
    %v504 = vld [vmem:[%s5] sm:$0xff]
    %v505 = vld [vmem:[%s5 + $0x8] sm:$0xff]
    %v506 = vld [vmem:[%s6] sm:$0xff]
    %v507 = vld [vmem:[%s6 + $0x8] sm:$0xff]
    %509 = vset.pattern.permute.xlu0 0
    %510 = vperm.xlu0 %509, %v506
    %v511 = vpop.permute.xlu0 %510
    %514 = vset.pattern.permute.xlu0 0
    %515 = vperm.xlu0 %514, %v507
    %v516 = vpop.permute.xlu0 %515
    %vm518 = vcmask 130048
    %v520 = vsel %vm518, %v504, 0
    %v523 = vsel %vm518, %v505, 0
    %525 = vmatprep.subr.mxu0 0.0
    %526 = vmatpush1.msra.mxu0 %v496
    %527 = vmatprep.subr.mxu0 0.0
    %528 = vmatpush1.msra.mxu0 %v501
    %529 = vmatprep.subr.mxu0 0.0
    %530 = vmatpush1.msra.mxu0 0.0
    %531 = vmatprep.subr.mxu0 0.0
    %532 = vmatpush1.msra.mxu0 0.0
    %533 = vmatprep.subr.mxu0 0.0
    %534 = vmatpush1.msra.mxu0 0.0
    %535 = vmatprep.subr.mxu0 0.0
    %536 = vmatpush1.msra.mxu0 0.0
    %537 = vmatprep.subr.mxu0 0.0
    %538 = vmatpush1.msra.mxu0 0.0
    %539 = vmatprep.subr.mxu0 0.0
    %540 = vmatpush1.msra.mxu0 0.0
    %541 = vmatprep.subr.mxu0 0.0
    %542 = vmatpush1.msra.mxu0 0.0
    %543 = vmatprep.subr.mxu0 0.0
    %544 = vmatpush1.msra.mxu0 0.0
    %545 = vmatprep.subr.mxu0 0.0
    %546 = vmatpush1.msra.mxu0 0.0
    %547 = vmatprep.subr.mxu0 0.0
    %548 = vmatpush1.msra.mxu0 0.0
    %549 = vmatprep.subr.mxu0 0.0
    %550 = vmatpush1.msra.mxu0 0.0
    %551 = vmatprep.subr.mxu0 0.0
    %552 = vmatpush1.msra.mxu0 0.0
    %553 = vmatprep.subr.mxu0 0.0
    %554 = vmatpush1.msra.mxu0 0.0
    %555 = vmatprep.subr.mxu0 0.0
    %556 = vmatpush1.msra.mxu0 0.0
    %557 = vmatprep.subr.mxu0 0.0
    %558 = vmatpush1.msra.mxu0 0.0
    %559 = vmatprep.subr.mxu0 0.0
    %560 = vmatpush1.msra.mxu0 0.0
    %561 = vmatprep.subr.mxu0 0.0
    %562 = vmatpush1.msra.mxu0 0.0
    %563 = vmatprep.subr.mxu0 0.0
    %564 = vmatpush1.msra.mxu0 0.0
    %565 = vmatprep.subr.mxu0 0.0
    %566 = vmatpush1.msra.mxu0 0.0
    %567 = vmatprep.subr.mxu0 0.0
    %568 = vmatpush1.msra.mxu0 0.0
    %569 = vmatprep.subr.mxu0 0.0
    %570 = vmatpush1.msra.mxu0 0.0
    %571 = vmatprep.subr.mxu0 0.0
    %572 = vmatpush1.msra.mxu0 0.0
    %573 = vmatprep.subr.mxu0 0.0
    %574 = vmatpush1.msra.mxu0 0.0
    %575 = vmatprep.subr.mxu0 0.0
    %576 = vmatpush1.msra.mxu0 0.0
    %577 = vmatprep.subr.mxu0 0.0
    %578 = vmatpush1.msra.mxu0 0.0
    %579 = vmatprep.subr.mxu0 0.0
    %580 = vmatpush1.msra.mxu0 0.0
    %581 = vmatprep.subr.mxu0 0.0
    %582 = vmatpush1.msra.mxu0 0.0
    %583 = vmatprep.subr.mxu0 0.0
    %584 = vmatpush1.msra.mxu0 0.0
    %585 = vmatprep.subr.mxu0 0.0
    %586 = vmatpush1.msra.mxu0 0.0
    %587 = vmatprep.subr.mxu0 0.0
    %588 = vmatpush1.msra.mxu0 0.0
    %589 = vmatprep.mubr.f32.mxu0 0.0
    %590 = vmatmul.mubr.f32.gmra.mrb[0].mxu0 %v520
    %v591 = vpop.f32.mrb[0].mxu0
    %v592 = vadd.f32 %v511, %v591
    %v593 = vpop.f32.mrb[0].mxu0
    %594 = vmatprep.mubr.f32.mxu0 0.0
    %595 = vmatmul.mubr.f32.gmra.mrb[0].mxu0 %v523
    %v596 = vpop.f32.mrb[0].mxu0
    %v597 = vadd.f32 %v516, %v596
    %v598 = vpop.f32.mrb[0].mxu0
    %599 = vdwg.mxu0
    %vm600 = vcmp.gt.f32.partialorder %v592, 0.0
    %vm601 = vcmp.gt.f32.partialorder %v597, 0.0
    %v602 = vmin.f32 %v592, 0.0
    %v603 = vmin.f32 %v597, 0.0
    %v604 = vmul.f32 %v602, 1.442695
    %v605 = vpow.pop %v604
    %v606 = vmul.f32 %v603, 1.442695
    %v607 = vpow.pop %v606
    %v608 = vsub.f32 %v605, 1.0
    %v609 = vsub.f32 %v607, 1.0
    %v610 = vsel %vm600, %v592, %v608
    %v611 = vsel %vm601, %v597, %v609
    %v612 = vld [vmem:[%s7] sm:$0xff]
    %v613 = vld [vmem:[%s7 + $0x8] sm:$0xff]
    %v615 = vsel %vm518, %v610, 0
    %v618 = vsel %vm518, %v611, 0
    %620 = vmatprep.subr.mxu0 0.0
    %621 = vmatpush1.msra.mxu0 %v612
    %622 = vmatprep.subr.mxu0 0.0
    %623 = vmatpush1.msra.mxu0 %v613
    %624 = vmatprep.subr.mxu0 0.0
    %625 = vmatpush1.msra.mxu0 0.0
    %626 = vmatprep.subr.mxu0 0.0
    %627 = vmatpush1.msra.mxu0 0.0
    %628 = vmatprep.subr.mxu0 0.0
    %629 = vmatpush1.msra.mxu0 0.0
    %630 = vmatprep.subr.mxu0 0.0
    %631 = vmatpush1.msra.mxu0 0.0
    %632 = vmatprep.subr.mxu0 0.0
    %633 = vmatpush1.msra.mxu0 0.0
    %634 = vmatprep.subr.mxu0 0.0
    %635 = vmatpush1.msra.mxu0 0.0
    %636 = vmatprep.subr.mxu0 0.0
    %637 = vmatpush1.msra.mxu0 0.0
    %638 = vmatprep.subr.mxu0 0.0
    %639 = vmatpush1.msra.mxu0 0.0
    %640 = vmatprep.subr.mxu0 0.0
    %641 = vmatpush1.msra.mxu0 0.0
    %642 = vmatprep.subr.mxu0 0.0
    %643 = vmatpush1.msra.mxu0 0.0
    %644 = vmatprep.subr.mxu0 0.0
    %645 = vmatpush1.msra.mxu0 0.0
    %646 = vmatprep.subr.mxu0 0.0
    %647 = vmatpush1.msra.mxu0 0.0
    %648 = vmatprep.subr.mxu0 0.0
    %649 = vmatpush1.msra.mxu0 0.0
    %650 = vmatprep.subr.mxu0 0.0
    %651 = vmatpush1.msra.mxu0 0.0
    %652 = vmatprep.subr.mxu0 0.0
    %653 = vmatpush1.msra.mxu0 0.0
    %654 = vmatprep.subr.mxu0 0.0
    %655 = vmatpush1.msra.mxu0 0.0
    %656 = vmatprep.subr.mxu0 0.0
    %657 = vmatpush1.msra.mxu0 0.0
    %658 = vmatprep.subr.mxu0 0.0
    %659 = vmatpush1.msra.mxu0 0.0
    %660 = vmatprep.subr.mxu0 0.0
    %661 = vmatpush1.msra.mxu0 0.0
    %662 = vmatprep.subr.mxu0 0.0
    %663 = vmatpush1.msra.mxu0 0.0
    %664 = vmatprep.subr.mxu0 0.0
    %665 = vmatpush1.msra.mxu0 0.0
    %666 = vmatprep.subr.mxu0 0.0
    %667 = vmatpush1.msra.mxu0 0.0
    %668 = vmatprep.subr.mxu0 0.0
    %669 = vmatpush1.msra.mxu0 0.0
    %670 = vmatprep.subr.mxu0 0.0
    %671 = vmatpush1.msra.mxu0 0.0
    %672 = vmatprep.subr.mxu0 0.0
    %673 = vmatpush1.msra.mxu0 0.0
    %674 = vmatprep.subr.mxu0 0.0
    %675 = vmatpush1.msra.mxu0 0.0
    %676 = vmatprep.subr.mxu0 0.0
    %677 = vmatpush1.msra.mxu0 0.0
    %678 = vmatprep.subr.mxu0 0.0
    %679 = vmatpush1.msra.mxu0 0.0
    %680 = vmatprep.subr.mxu0 0.0
    %681 = vmatpush1.msra.mxu0 0.0
    %682 = vmatprep.subr.mxu0 0.0
    %683 = vmatpush1.msra.mxu0 0.0
    %684 = vmatprep.mubr.f32.mxu0 0.0
    %685 = vmatmul.mubr.f32.gmra.mrb[0].mxu0 %v615
    %v686 = vpop.f32.mrb[0].mxu0
    %v687 = vadd.f32 0.0, %v686
    %v688 = vpop.f32.mrb[0].mxu0
    %689 = vmatprep.mubr.f32.mxu0 0.0
    %690 = vmatmul.mubr.f32.gmra.mrb[0].mxu0 %v618
    %v691 = vpop.f32.mrb[0].mxu0
    %v692 = vadd.f32 0.0, %v691
    %v693 = vpop.f32.mrb[0].mxu0
    %694 = vdwg.mxu0
    %v695 = vld [vmem:[%s8] sm:$0xff]
    %v696 = vld [vmem:[%s8 + $0x8] sm:$0xff]
    %v698 = vsel %vm518, %v695, 0
    %v701 = vsel %vm518, %v696, 0
    %703 = vmatprep.subr.mxu0 0.0
    %704 = vmatpush1.msra.mxu0 %v687
    %705 = vmatprep.subr.mxu0 0.0
    %706 = vmatpush1.msra.mxu0 %v692
    %707 = vmatprep.subr.mxu0 0.0
    %708 = vmatpush1.msra.mxu0 0.0
    %709 = vmatprep.subr.mxu0 0.0
    %710 = vmatpush1.msra.mxu0 0.0
    %711 = vmatprep.subr.mxu0 0.0
    %712 = vmatpush1.msra.mxu0 0.0
    %713 = vmatprep.subr.mxu0 0.0
    %714 = vmatpush1.msra.mxu0 0.0
    %715 = vmatprep.subr.mxu0 0.0
    %716 = vmatpush1.msra.mxu0 0.0
    %717 = vmatprep.subr.mxu0 0.0
    %718 = vmatpush1.msra.mxu0 0.0
    %719 = vmatprep.subr.mxu0 0.0
    %720 = vmatpush1.msra.mxu0 0.0
    %721 = vmatprep.subr.mxu0 0.0
    %722 = vmatpush1.msra.mxu0 0.0
    %723 = vmatprep.subr.mxu0 0.0
    %724 = vmatpush1.msra.mxu0 0.0
    %725 = vmatprep.subr.mxu0 0.0
    %726 = vmatpush1.msra.mxu0 0.0
    %727 = vmatprep.subr.mxu0 0.0
    %728 = vmatpush1.msra.mxu0 0.0
    %729 = vmatprep.subr.mxu0 0.0
    %730 = vmatpush1.msra.mxu0 0.0
    %731 = vmatprep.subr.mxu0 0.0
    %732 = vmatpush1.msra.mxu0 0.0
    %733 = vmatprep.subr.mxu0 0.0
    %734 = vmatpush1.msra.mxu0 0.0
    %735 = vmatprep.subr.mxu0 0.0
    %736 = vmatpush1.msra.mxu0 0.0
    %737 = vmatprep.subr.mxu0 0.0
    %738 = vmatpush1.msra.mxu0 0.0
    %739 = vmatprep.subr.mxu0 0.0
    %740 = vmatpush1.msra.mxu0 0.0
    %741 = vmatprep.subr.mxu0 0.0
    %742 = vmatpush1.msra.mxu0 0.0
    %743 = vmatprep.subr.mxu0 0.0
    %744 = vmatpush1.msra.mxu0 0.0
    %745 = vmatprep.subr.mxu0 0.0
    %746 = vmatpush1.msra.mxu0 0.0
    %747 = vmatprep.subr.mxu0 0.0
    %748 = vmatpush1.msra.mxu0 0.0
    %749 = vmatprep.subr.mxu0 0.0
    %750 = vmatpush1.msra.mxu0 0.0
    %751 = vmatprep.subr.mxu0 0.0
    %752 = vmatpush1.msra.mxu0 0.0
    %753 = vmatprep.subr.mxu0 0.0
    %754 = vmatpush1.msra.mxu0 0.0
    %755 = vmatprep.subr.mxu0 0.0
    %756 = vmatpush1.msra.mxu0 0.0
    %757 = vmatprep.subr.mxu0 0.0
    %758 = vmatpush1.msra.mxu0 0.0
    %759 = vmatprep.subr.mxu0 0.0
    %760 = vmatpush1.msra.mxu0 0.0
    %761 = vmatprep.subr.mxu0 0.0
    %762 = vmatpush1.msra.mxu0 0.0
    %763 = vmatprep.subr.mxu0 0.0
    %764 = vmatpush1.msra.mxu0 0.0
    %765 = vmatprep.subr.mxu0 0.0
    %766 = vmatpush1.msra.mxu0 0.0
    %767 = vmatprep.mubr.f32.mxu0 0.0
    %768 = vmatmul.mubr.f32.gmra.mrb[0].mxu0 %v698
    %v769 = vpop.f32.mrb[0].mxu0
    %v770 = vadd.f32 0.0, %v769
    %v771 = vpop.f32.mrb[0].mxu0
    %772 = vmatprep.mubr.f32.mxu0 0.0
    %773 = vmatmul.mubr.f32.gmra.mrb[0].mxu0 %v701
    %v774 = vpop.f32.mrb[0].mxu0
    %v775 = vadd.f32 0.0, %v774
    %v776 = vpop.f32.mrb[0].mxu0
    %777 = vdwg.mxu0
    %v778 = vld [vmem:[%s9] sm:$0xff]
    %v779 = vadd.f32 %v778, %v770
    %781 = vrot.lane.b32.xlu0 %v775, 127
    %v782 = vpop.permute.xlu0 %781
    %v784 = vadd.f32 %v779, %v782
    %vm785 = vcmask 7168
    %786 = vst.msk [vmem:[%s10] sm:$0xff] %vm785, %v784
    %v787 = vld [vmem:[%s7] sm:$0xff]
    %v788 = vld [vmem:[%s7 + $0x8] sm:$0xff]
    %789 = vrot.lane.b32.xlu0 %v610, 112
    %v790 = vpop.permute.xlu0 %789
    %791 = vrot.lane.b32.xlu0 %v611, 112
    %v792 = vpop.permute.xlu0 %791
    %v793 = vsel %vm518, %v790, 0
    %v795 = vsel %vm518, %v792, 0
    %797 = vmatprep.subr.mxu0 0.0
    %798 = vmatpush1.msra.mxu0 %v787
    %799 = vmatprep.subr.mxu0 0.0
    %800 = vmatpush1.msra.mxu0 %v788
    %801 = vmatprep.subr.mxu0 0.0
    %802 = vmatpush1.msra.mxu0 0.0
    %803 = vmatprep.subr.mxu0 0.0
    %804 = vmatpush1.msra.mxu0 0.0
    %805 = vmatprep.subr.mxu0 0.0
    %806 = vmatpush1.msra.mxu0 0.0
    %807 = vmatprep.subr.mxu0 0.0
    %808 = vmatpush1.msra.mxu0 0.0
    %809 = vmatprep.subr.mxu0 0.0
    %810 = vmatpush1.msra.mxu0 0.0
    %811 = vmatprep.subr.mxu0 0.0
    %812 = vmatpush1.msra.mxu0 0.0
    %813 = vmatprep.subr.mxu0 0.0
    %814 = vmatpush1.msra.mxu0 0.0
    %815 = vmatprep.subr.mxu0 0.0
    %816 = vmatpush1.msra.mxu0 0.0
    %817 = vmatprep.subr.mxu0 0.0
    %818 = vmatpush1.msra.mxu0 0.0
    %819 = vmatprep.subr.mxu0 0.0
    %820 = vmatpush1.msra.mxu0 0.0
    %821 = vmatprep.subr.mxu0 0.0
    %822 = vmatpush1.msra.mxu0 0.0
    %823 = vmatprep.subr.mxu0 0.0
    %824 = vmatpush1.msra.mxu0 0.0
    %825 = vmatprep.subr.mxu0 0.0
    %826 = vmatpush1.msra.mxu0 0.0
    %827 = vmatprep.subr.mxu0 0.0
    %828 = vmatpush1.msra.mxu0 0.0
    %829 = vmatprep.subr.mxu0 0.0
    %830 = vmatpush1.msra.mxu0 0.0
    %831 = vmatprep.subr.mxu0 0.0
    %832 = vmatpush1.msra.mxu0 0.0
    %833 = vmatprep.subr.mxu0 0.0
    %834 = vmatpush1.msra.mxu0 0.0
    %835 = vmatprep.subr.mxu0 0.0
    %836 = vmatpush1.msra.mxu0 0.0
    %837 = vmatprep.subr.mxu0 0.0
    %838 = vmatpush1.msra.mxu0 0.0
    %839 = vmatprep.subr.mxu0 0.0
    %840 = vmatpush1.msra.mxu0 0.0
    %841 = vmatprep.subr.mxu0 0.0
    %842 = vmatpush1.msra.mxu0 0.0
    %843 = vmatprep.subr.mxu0 0.0
    %844 = vmatpush1.msra.mxu0 0.0
    %845 = vmatprep.subr.mxu0 0.0
    %846 = vmatpush1.msra.mxu0 0.0
    %847 = vmatprep.subr.mxu0 0.0
    %848 = vmatpush1.msra.mxu0 0.0
    %849 = vmatprep.subr.mxu0 0.0
    %850 = vmatpush1.msra.mxu0 0.0
    %851 = vmatprep.subr.mxu0 0.0
    %852 = vmatpush1.msra.mxu0 0.0
    %853 = vmatprep.subr.mxu0 0.0
    %854 = vmatpush1.msra.mxu0 0.0
    %855 = vmatprep.subr.mxu0 0.0
    %856 = vmatpush1.msra.mxu0 0.0
    %857 = vmatprep.subr.mxu0 0.0
    %858 = vmatpush1.msra.mxu0 0.0
    %859 = vmatprep.subr.mxu0 0.0
    %860 = vmatpush1.msra.mxu0 0.0
    %861 = vmatprep.mubr.f32.mxu0 0.0
    %862 = vmatmul.mubr.f32.gmra.mrb[0].mxu0 %v793
    %v863 = vpop.f32.mrb[0].mxu0
    %v864 = vadd.f32 0.0, %v863
    %v865 = vpop.f32.mrb[0].mxu0
    %866 = vmatprep.mubr.f32.mxu0 0.0
    %867 = vmatmul.mubr.f32.gmra.mrb[0].mxu0 %v795
    %v868 = vpop.f32.mrb[0].mxu0
    %v869 = vadd.f32 0.0, %v868
    %v870 = vpop.f32.mrb[0].mxu0
    %871 = vdwg.mxu0
    %v872 = vld [vmem:[%s8] sm:$0xff]
    %v873 = vld [vmem:[%s8 + $0x8] sm:$0xff]
    %v875 = vsel %vm518, %v872, 0
    %v878 = vsel %vm518, %v873, 0
    %880 = vmatprep.subr.mxu0 0.0
    %881 = vmatpush1.msra.mxu0 %v864
    %882 = vmatprep.subr.mxu0 0.0
    %883 = vmatpush1.msra.mxu0 %v869
    %884 = vmatprep.subr.mxu0 0.0
    %885 = vmatpush1.msra.mxu0 0.0
    %886 = vmatprep.subr.mxu0 0.0
    %887 = vmatpush1.msra.mxu0 0.0
    %888 = vmatprep.subr.mxu0 0.0
    %889 = vmatpush1.msra.mxu0 0.0
    %890 = vmatprep.subr.mxu0 0.0
    %891 = vmatpush1.msra.mxu0 0.0
    %892 = vmatprep.subr.mxu0 0.0
    %893 = vmatpush1.msra.mxu0 0.0
    %894 = vmatprep.subr.mxu0 0.0
    %895 = vmatpush1.msra.mxu0 0.0
    %896 = vmatprep.subr.mxu0 0.0
    %897 = vmatpush1.msra.mxu0 0.0
    %898 = vmatprep.subr.mxu0 0.0
    %899 = vmatpush1.msra.mxu0 0.0
    %900 = vmatprep.subr.mxu0 0.0
    %901 = vmatpush1.msra.mxu0 0.0
    %902 = vmatprep.subr.mxu0 0.0
    %903 = vmatpush1.msra.mxu0 0.0
    %904 = vmatprep.subr.mxu0 0.0
    %905 = vmatpush1.msra.mxu0 0.0
    %906 = vmatprep.subr.mxu0 0.0
    %907 = vmatpush1.msra.mxu0 0.0
    %908 = vmatprep.subr.mxu0 0.0
    %909 = vmatpush1.msra.mxu0 0.0
    %910 = vmatprep.subr.mxu0 0.0
    %911 = vmatpush1.msra.mxu0 0.0
    %912 = vmatprep.subr.mxu0 0.0
    %913 = vmatpush1.msra.mxu0 0.0
    %914 = vmatprep.subr.mxu0 0.0
    %915 = vmatpush1.msra.mxu0 0.0
    %916 = vmatprep.subr.mxu0 0.0
    %917 = vmatpush1.msra.mxu0 0.0
    %918 = vmatprep.subr.mxu0 0.0
    %919 = vmatpush1.msra.mxu0 0.0
    %920 = vmatprep.subr.mxu0 0.0
    %921 = vmatpush1.msra.mxu0 0.0
    %922 = vmatprep.subr.mxu0 0.0
    %923 = vmatpush1.msra.mxu0 0.0
    %924 = vmatprep.subr.mxu0 0.0
    %925 = vmatpush1.msra.mxu0 0.0
    %926 = vmatprep.subr.mxu0 0.0
    %927 = vmatpush1.msra.mxu0 0.0
    %928 = vmatprep.subr.mxu0 0.0
    %929 = vmatpush1.msra.mxu0 0.0
    %930 = vmatprep.subr.mxu0 0.0
    %931 = vmatpush1.msra.mxu0 0.0
    %932 = vmatprep.subr.mxu0 0.0
    %933 = vmatpush1.msra.mxu0 0.0
    %934 = vmatprep.subr.mxu0 0.0
    %935 = vmatpush1.msra.mxu0 0.0
    %936 = vmatprep.subr.mxu0 0.0
    %937 = vmatpush1.msra.mxu0 0.0
    %938 = vmatprep.subr.mxu0 0.0
    %939 = vmatpush1.msra.mxu0 0.0
    %940 = vmatprep.subr.mxu0 0.0
    %941 = vmatpush1.msra.mxu0 0.0
    %942 = vmatprep.subr.mxu0 0.0
    %943 = vmatpush1.msra.mxu0 0.0
    %944 = vmatprep.mubr.f32.mxu0 0.0
    %945 = vmatmul.mubr.f32.gmra.mrb[0].mxu0 %v875
    %v946 = vpop.f32.mrb[0].mxu0
    %v947 = vadd.f32 0.0, %v946
    %v948 = vpop.f32.mrb[0].mxu0
    %949 = vmatprep.mubr.f32.mxu0 0.0
    %950 = vmatmul.mubr.f32.gmra.mrb[0].mxu0 %v878
    %v951 = vpop.f32.mrb[0].mxu0
    %v952 = vadd.f32 0.0, %v951
    %v953 = vpop.f32.mrb[0].mxu0
    %954 = vdwg.mxu0
    %v955 = vld [vmem:[%s9] sm:$0xff]
    %v956 = vadd.f32 %v955, %v947
    %958 = vrot.lane.b32.xlu0 %v952, 127
    %v959 = vpop.permute.xlu0 %958
    %v961 = vadd.f32 %v956, %v959
    %963 = vrot.lane.b32.xlu0 %v961, 1
    %v964 = vpop.permute.xlu0 %963
    %vm966 = vcmask 15368
    %967 = vst.msk [vmem:[%s10] sm:$0xff] %vm966, %v964
    // Predicated region
    $region46: #{pronet_forward.1} parent=1 // pred_check
      _
    $region47: #{pronet_forward.1} parent=1 // pred_check_branch
      %969 = sbr.rel (0) target = $region49
    $region48: #{pronet_forward.1} parent=1 // pred_region
      _
    $region49: #{pronet_forward.1} parent=1 // pred_fallthru
      _
    // Predicated region
    $region50: #{pronet_forward.1} parent=1 // pred_check
      _
    $region51: #{pronet_forward.1} parent=1 // pred_check_branch
      %971 = sbr.rel (0) target = $region53
    $region52: #{pronet_forward.1} parent=1 // pred_region
      _
    $region53: #{pronet_forward.1} parent=1 // pred_fallthru
      _
    %972 = vsyncpa [#allocation3], 1

</llo_original>
